<compile_context>
chip_gen: v7x
topology: tpu7x:2x2x1
jax: 0.10.0
libtpu: 0.0.40
codegen_flags: <defaults>
</compile_context>

<pallas_src>
import functools

import jax
import jax.numpy as jnp
from jax.experimental import pallas as pl
from jax.experimental.pallas import tpu as pltpu


_MAX_BLOCK_BYTES = 4 * 1024 * 1024          # target per-grid-step output block size
_ONE_HOT_MAX_V = 2048                       # one-hot MXU gather threshold (~1024 is plenty on v5e too)
_SINGLE_BUFFER_MIN_BYTES = 4 * 1024 * 1024  # single-buffer resident tables above this size
_MAX_TOKENS_PER_CALL = 32768                # bounds SMEM scalar prefetch on the HBM path (128 KiB of ids)


def _vmem_budget_bytes():
    """Per-generation scoped-VMEM limit: ~3/4 of capacity, capped at 96 MiB."""
    try:
        cap = int(pltpu.get_tpu_info().vmem_capacity_bytes)
    except Exception:
        cap = 64 * 1024 * 1024  # conservative fallback (v7x-sized VMEM)
    return min((cap * 3) // 4, 96 * 1024 * 1024)


def _pick_tile(n_tokens, embed_dim, itemsize, cap):
    """Tokens per grid step: multiple of 128, ~_MAX_BLOCK_BYTES per output block."""
    bytes_per_row = max(1, embed_dim * itemsize)
    t = _MAX_BLOCK_BYTES // bytes_per_row
    n_rounded = ((max(1, n_tokens) + 127) // 128) * 128
    t = min(int(t), int(cap), int(n_rounded))
    t = max(128, (t // 128) * 128)
    return int(t)


# ---------------------------------------------------------------------------
# Resident-table kernels (whole (V, D) table lives in VMEM).
# ---------------------------------------------------------------------------

def _embedding_onehot_kernel(ids_ref, w_ref, o_ref):
    """Small-vocab gather as a one-hot matmul on the MXU (one (tile, D) store)."""
    ids = ids_ref[...]                                     # (tile, 1) int32, sublane-major
    tile = ids.shape[0]
    v = w_ref.shape[0]
    iota = jax.lax.broadcasted_iota(jnp.int32, (tile, v), 1)
    onehot = (iota == ids).astype(w_ref.dtype)             # (tile, V)
    out = jnp.dot(
        onehot,
        w_ref[...],
        preferred_element_type=jnp.float32,
        precision=jax.lax.Precision.HIGHEST,               # bit-exact row reconstruction
    )
    o_ref[...] = out.astype(o_ref.dtype)


def _embedding_take_kernel(ids_ref, w_ref, o_ref):
    """Resident larger-vocab gather: one vectorized take over the whole tile."""
    ids = ids_ref[...][:, 0]                               # (tile,) int32
    # TODO(synk): if this gather fails to lower on older Mosaic versions, swap
    # to a V-chunked one-hot matmul accumulation.
    o_ref[...] = jnp.take(w_ref[...], ids, axis=0).astype(o_ref.dtype)


# ---------------------------------------------------------------------------
# Huge-table kernel (table stays in HBM, rows are DMA-gathered per tile).
# ---------------------------------------------------------------------------

def _embedding_hbm_kernel(ids_ref, w_hbm, o_ref, sem, *, tile):
    """DMA each requested row HBM -> output VMEM block; all issued before waiting."""
    base = pl.program_id(0) * tile

    def _issue(t, carry):
        row = ids_ref[base + t]
        pltpu.make_async_copy(
            w_hbm.at[pl.ds(row, 1), :], o_ref.at[pl.ds(t, 1), :], sem.at[0]
        ).start()
        return carry

    jax.lax.fori_loop(0, tile, _issue, 0)

    def _drain(t, carry):
        # Same-shaped descriptor; the wait only needs the per-copy size + sem.
        pltpu.make_async_copy(
            w_hbm.at[pl.ds(0, 1), :], o_ref.at[pl.ds(0, 1), :], sem.at[0]
        ).wait()
        return carry

    jax.lax.fori_loop(0, tile, _drain, 0)


# ---------------------------------------------------------------------------
# Wrappers
# ---------------------------------------------------------------------------

def _gather_resident(flat, weight, tile, vmem_limit, use_onehot, single_buffer):
    V, D = weight.shape
    n = flat.shape[0]
    pad = (-n) % tile
    if pad:
        flat = jnp.concatenate([flat, jnp.zeros((pad,), jnp.int32)])
    n_pad = n + pad
    ids2d = flat.reshape(n_pad, 1)  # sublane-major ids -> cheap lane broadcast in-kernel

    spec_kwargs = {}
    if single_buffer:
        # Constant block index: no need to double-buffer a large resident table.
        spec_kwargs["pipeline_mode"] = pl.Buffered(1)
    table_spec = pl.BlockSpec((V, D), lambda i: (0, 0), **spec_kwargs)

    kernel = _embedding_onehot_kernel if use_onehot else _embedding_take_kernel

    out = pl.pallas_call(
        kernel,
        out_shape=jax.ShapeDtypeStruct((n_pad, D), weight.dtype),
        grid=(n_pad // tile,),
        in_specs=[
            pl.BlockSpec((tile, 1), lambda i: (i, 0)),     # current tile's ids in VMEM
            table_spec,                                    # resident (V, D) table
        ],
        out_specs=pl.BlockSpec((tile, D), lambda i: (i, 0)),
        compiler_params=pltpu.CompilerParams(
            dimension_semantics=("parallel",),
            vmem_limit_bytes=vmem_limit,
        ),
    )(ids2d, weight)
    return out[:n]


def _gather_hbm(flat, weight, tile, vmem_limit):
    V, D = weight.shape
    n = flat.shape[0]
    outs = []
    for start in range(0, n, _MAX_TOKENS_PER_CALL):
        chunk = flat[start:start + _MAX_TOKENS_PER_CALL]
        c = chunk.shape[0]
        pad = (-c) % tile
        if pad:
            chunk = jnp.concatenate([chunk, jnp.zeros((pad,), jnp.int32)])
        cp = c + pad

        out = pl.pallas_call(
            functools.partial(_embedding_hbm_kernel, tile=tile),
            out_shape=jax.ShapeDtypeStruct((cp, D), weight.dtype),
            grid_spec=pltpu.PrefetchScalarGridSpec(
                num_scalar_prefetch=1,                     # only this chunk's ids in SMEM
                grid=(cp // tile,),
                in_specs=[pl.BlockSpec(memory_space=pl.ANY)],
                out_specs=pl.BlockSpec((tile, D), lambda i, ids: (i, 0)),
                scratch_shapes=[pltpu.SemaphoreType.DMA((1,))],
            ),
            compiler_params=pltpu.CompilerParams(
                dimension_semantics=("parallel",),
                vmem_limit_bytes=vmem_limit,
            ),
        )(chunk, weight)
        outs.append(out[:c])
    return outs[0] if len(outs) == 1 else jnp.concatenate(outs, axis=0)


def embedding_pallas(ids, weight):
    """For each integer in `ids`, return that row of `weight` (PyTorch Embedding.forward)."""
    V, D = weight.shape
    orig_shape = ids.shape
    # Clamp so bad ids can never address out of bounds (PyTorch raises; we clamp).
    flat = jnp.clip(jnp.reshape(ids, (-1,)).astype(jnp.int32), 0, V - 1)
    n = int(flat.shape[0])

    itemsize = weight.dtype.itemsize
    table_bytes = V * D * itemsize
    vmem_limit = _vmem_budget_bytes()
    # Single-buffered table + double-buffered output/id blocks + headroom must fit
    # the scoped limit: ~64 MiB resident tables on 128 MiB parts, ~24 MiB on v7x.
    resident_max = min(vmem_limit - 6 * _MAX_BLOCK_BYTES, 64 * 1024 * 1024)
    resident = table_bytes <= resident_max

    if resident:
        tile = _pick_tile(n, D, itemsize, cap=512)
        use_onehot = V <= _ONE_HOT_MAX_V
        single_buffer = table_bytes >= _SINGLE_BUFFER_MIN_BYTES
        out = _gather_resident(flat, weight, tile, vmem_limit, use_onehot, single_buffer)
    else:
        tile = _pick_tile(n, D, itemsize, cap=256)
        out = _gather_hbm(flat, weight, tile, vmem_limit)

    return out.reshape(*orig_shape, D)


if __name__ == "__main__":
    num_embeddings, embedding_dim = 64, 32
    batch, seq = 2, 8

    key = jax.random.PRNGKey(0)
    k_w, k_x = jax.random.split(key)

    # Matches nn.Parameter(t.ones(V, D).uniform_(-1, 1)) semantics: uniform in [-1, 1).
    weight = jax.random.uniform(
        k_w, (num_embeddings, embedding_dim), dtype=jnp.float32, minval=-1.0, maxval=1.0
    )
    ids = jax.random.randint(k_x, (batch, seq), 0, num_embeddings, dtype=jnp.int32)

    out = embedding_pallas(ids, weight)
    out = jax.block_until_ready(out)

    ref = weight[ids]  # pure-JAX reference: weight[x]
    assert out.shape == (batch, seq, embedding_dim)
    assert out.dtype == weight.dtype
    assert jnp.allclose(out, ref, atol=1e-5, rtol=1e-5), "mismatch vs reference gather"

    print("KERNEL_OK")
</pallas_src>

<mosaic_0001>
module attributes {stable_mosaic.version = 11 : i64} {
  func.func @_embedding_onehot_kernel(%arg0: i32, %arg1: memref<128x1xi32, #tpu.memory_space<vmem>>, %arg2: memref<64x32xf32, #tpu.memory_space<vmem>>, %arg3: memref<128x32xf32, #tpu.memory_space<vmem>>) attributes {dimension_semantics = [#tpu.dimension_semantics<parallel>], iteration_bounds = array<i64: 1>, scalar_prefetch = 0 : i64, scratch_operands = 0 : i64, tpu.core_type = #tpu.core_type<tc>, window_params = [{transform_indices = @transform_0, window_bounds = array<i64: 128, 1>}, {pipeline_mode = #tpu.pipeline_mode<synchronous>, transform_indices = @transform_1, window_bounds = array<i64: 64, 32>}, {transform_indices = @transform_2, window_bounds = array<i64: 128, 32>}]} {
    %c0 = arith.constant 0 : index
    %c0_0 = arith.constant 0 : index
    %0 = vector.load %arg1[%c0, %c0_0] : memref<128x1xi32, #tpu.memory_space<vmem>>, vector<128x1xi32>
    %1 = tpu.iota {dimensions = array<i32: 1>} : vector<128x64xi32>
    %2 = vector.broadcast %0 : vector<128x1xi32> to vector<128x64xi32>
    %3 = arith.cmpi eq, %1, %2 : vector<128x64xi32>
    %4 = arith.extui %3 : vector<128x64xi1> to vector<128x64xi32>
    %5 = arith.sitofp %4 : vector<128x64xi32> to vector<128x64xf32>
    %c0_1 = arith.constant 0 : index
    %c0_2 = arith.constant 0 : index
    %6 = vector.load %arg2[%c0_1, %c0_2] : memref<64x32xf32, #tpu.memory_space<vmem>>, vector<64x32xf32>
    %cst = arith.constant dense<0.000000e+00> : vector<128x32xf32>
    %7 = tpu.matmul %5, %6, %cst {dimension_numbers = #tpu.dot_dimension_numbers<[1], [0], [0], [1], [0, 0, 1, 1], [], []>, precision = #tpu.contract_precision<fp32>} : vector<128x64xf32>, vector<64x32xf32>, vector<128x32xf32> -> vector<128x32xf32>
    %c0_3 = arith.constant 0 : index
    %c0_4 = arith.constant 0 : index
    %8 = vector.load %arg3[%c0_3, %c0_4] : memref<128x32xf32, #tpu.memory_space<vmem>>, vector<128x32xf32>
    tpu.vector_store %arg3[%c0_3, %c0_4], %7 {strides = array<i32>} : memref<128x32xf32, #tpu.memory_space<vmem>>, vector<128x32xf32>,
    return
  }
  func.func @transform_0(%arg0: i32) -> (i32, i32) {
    %c0_i32 = arith.constant 0 : i32
    %c0_i32_0 = arith.constant 0 : i32
    return %arg0, %c0_i32 : i32, i32
  }
  func.func @transform_1(%arg0: i32) -> (i32, i32) {
    %c0_i32 = arith.constant 0 : i32
    %c0_i32_0 = arith.constant 0 : i32
    %c0_i32_1 = arith.constant 0 : i32
    return %c0_i32, %c0_i32_0 : i32, i32
  }
  func.func @transform_2(%arg0: i32) -> (i32, i32) {
    %c0_i32 = arith.constant 0 : i32
    %c0_i32_0 = arith.constant 0 : i32
    return %arg0, %c0_i32 : i32, i32
  }
}

</mosaic_0001>

<llo_original>
// kernel: tpu_custom_call.1
$region0: #{tpu_custom_call.1}
  #allocation0 [shape = 'u32[]', space=smem, size = 0x4, offset = 0x4, fixed_abs, tag = 'smem constant byte address 0x4 - core index']
  #allocation1 [shape = 'u32[144,128]{1,0:T(1,128)}', space=vmem, size = 0x12000, scoped, tag = 'internal scratch']
  %s0 = inlined_call_operand.vmem [shape: s32[128,1], index: 0, kind: input, shape index: {}]
  %s1 = inlined_call_operand.vmem [shape: f32[64,32], index: 1, kind: input, shape index: {}]
  %s2 = inlined_call_operand.vmem [shape: f32[128,32], index: 2, kind: output, shape index: {}]
  %s3 = sld [smem:[#allocation0]]
  $region18: #{tpu_custom_call.1} parent=0
    _
  %s5 = ssub.s32 1, %s3
  %s6 = scalar_select 0, %s5, %s3
  // Predicated region
  $region2: #{tpu_custom_call.1} parent=0 // pred_check
    _
  $region3: #{tpu_custom_call.1} parent=0 // pred_check_branch
    %8 = sbr.rel (0) target = $region5
  $region4: #{tpu_custom_call.1} parent=0 // pred_region
    _
  $region5: #{tpu_custom_call.1} parent=0 // pred_fallthru
    _
  // Predicated region
  $region6: #{tpu_custom_call.1} parent=0 // pred_check
    _
  $region7: #{tpu_custom_call.1} parent=0 // pred_check_branch
    %10 = sbr.rel (0) target = $region9
  $region8: #{tpu_custom_call.1} parent=0 // pred_region
    _
  $region9: #{tpu_custom_call.1} parent=0 // pred_fallthru
    _
  %v11 = vld [vmem:[%s0] sm:$0xff]
  %v12 = vld [vmem:[%s0 + $0x8] sm:$0xff]
  %v13 = vld [vmem:[%s0 + $0x10] sm:$0xff]
  %v14 = vld [vmem:[%s0 + $0x18] sm:$0xff]
  %v15 = vld [vmem:[%s0 + $0x20] sm:$0xff]
  %v16 = vld [vmem:[%s0 + $0x28] sm:$0xff]
  %v17 = vld [vmem:[%s0 + $0x30] sm:$0xff]
  %v18 = vld [vmem:[%s0 + $0x38] sm:$0xff]
  %v19 = vld [vmem:[%s0 + $0x40] sm:$0xff]
  %v20 = vld [vmem:[%s0 + $0x48] sm:$0xff]
  %v21 = vld [vmem:[%s0 + $0x50] sm:$0xff]
  %v22 = vld [vmem:[%s0 + $0x58] sm:$0xff]
  %v23 = vld [vmem:[%s0 + $0x60] sm:$0xff]
  %v24 = vld [vmem:[%s0 + $0x68] sm:$0xff]
  %v25 = vld [vmem:[%s0 + $0x70] sm:$0xff]
  %v26 = vld [vmem:[%s0 + $0x78] sm:$0xff]
  %v27 = vlaneseq
  %v28 = vand.u32 %v27, 127
  %29 = vset.pattern.permute.xlu0 0
  %30 = vperm.xlu0 %29, %v11
  %v31 = vpop.permute.xlu0 %30
  %32 = vset.pattern.permute.xlu0 0
  %33 = vperm.xlu0 %32, %v12
  %v34 = vpop.permute.xlu0 %33
  %35 = vset.pattern.permute.xlu0 0
  %36 = vperm.xlu0 %35, %v13
  %v37 = vpop.permute.xlu0 %36
  %38 = vset.pattern.permute.xlu0 0
  %39 = vperm.xlu0 %38, %v14
  %v40 = vpop.permute.xlu0 %39
  %41 = vset.pattern.permute.xlu0 0
  %42 = vperm.xlu0 %41, %v15
  %v43 = vpop.permute.xlu0 %42
  %44 = vset.pattern.permute.xlu0 0
  %45 = vperm.xlu0 %44, %v16
  %v46 = vpop.permute.xlu0 %45
  %47 = vset.pattern.permute.xlu0 0
  %48 = vperm.xlu0 %47, %v17
  %v49 = vpop.permute.xlu0 %48
  %50 = vset.pattern.permute.xlu0 0
  %51 = vperm.xlu0 %50, %v18
  %v52 = vpop.permute.xlu0 %51
  %53 = vset.pattern.permute.xlu0 0
  %54 = vperm.xlu0 %53, %v19
  %v55 = vpop.permute.xlu0 %54
  %56 = vset.pattern.permute.xlu0 0
  %57 = vperm.xlu0 %56, %v20
  %v58 = vpop.permute.xlu0 %57
  %59 = vset.pattern.permute.xlu0 0
  %60 = vperm.xlu0 %59, %v21
  %v61 = vpop.permute.xlu0 %60
  %62 = vset.pattern.permute.xlu0 0
  %63 = vperm.xlu0 %62, %v22
  %v64 = vpop.permute.xlu0 %63
  %65 = vset.pattern.permute.xlu0 0
  %66 = vperm.xlu0 %65, %v23
  %v67 = vpop.permute.xlu0 %66
  %68 = vset.pattern.permute.xlu0 0
  %69 = vperm.xlu0 %68, %v24
  %v70 = vpop.permute.xlu0 %69
  %71 = vset.pattern.permute.xlu0 0
  %72 = vperm.xlu0 %71, %v25
  %v73 = vpop.permute.xlu0 %72
  %74 = vset.pattern.permute.xlu0 0
  %75 = vperm.xlu0 %74, %v26
  %v76 = vpop.permute.xlu0 %75
  %vm77 = vcmp.eq.s32.totalorder %v28, %v31
  %vm78 = vcmp.eq.s32.totalorder %v28, %v34
  %vm79 = vcmp.eq.s32.totalorder %v28, %v37
  %vm80 = vcmp.eq.s32.totalorder %v28, %v40
  %vm81 = vcmp.eq.s32.totalorder %v28, %v43
  %vm82 = vcmp.eq.s32.totalorder %v28, %v46
  %vm83 = vcmp.eq.s32.totalorder %v28, %v49
  %vm84 = vcmp.eq.s32.totalorder %v28, %v52
  %vm85 = vcmp.eq.s32.totalorder %v28, %v55
  %vm86 = vcmp.eq.s32.totalorder %v28, %v58
  %vm87 = vcmp.eq.s32.totalorder %v28, %v61
  %vm88 = vcmp.eq.s32.totalorder %v28, %v64
  %vm89 = vcmp.eq.s32.totalorder %v28, %v67
  %vm90 = vcmp.eq.s32.totalorder %v28, %v70
  %vm91 = vcmp.eq.s32.totalorder %v28, %v73
  %vm92 = vcmp.eq.s32.totalorder %v28, %v76
  %v93 = vsel %vm77, 1, 0
  %v94 = vsel %vm78, 1, 0
  %v95 = vsel %vm79, 1, 0
  %v96 = vsel %vm80, 1, 0
  %v97 = vsel %vm81, 1, 0
  %v98 = vsel %vm82, 1, 0
  %v99 = vsel %vm83, 1, 0
  %v100 = vsel %vm84, 1, 0
  %v101 = vsel %vm85, 1, 0
  %v102 = vsel %vm86, 1, 0
  %v103 = vsel %vm87, 1, 0
  %v104 = vsel %vm88, 1, 0
  %v105 = vsel %vm89, 1, 0
  %v106 = vsel %vm90, 1, 0
  %v107 = vsel %vm91, 1, 0
  %v108 = vsel %vm92, 1, 0
  %v109 = vcvt.s32.f32 %v93
  %v110 = vcvt.s32.f32 %v94
  %v111 = vcvt.s32.f32 %v95
  %v112 = vcvt.s32.f32 %v96
  %v113 = vcvt.s32.f32 %v97
  %v114 = vcvt.s32.f32 %v98
  %v115 = vcvt.s32.f32 %v99
  %v116 = vcvt.s32.f32 %v100
  %v117 = vcvt.s32.f32 %v101
  %v118 = vcvt.s32.f32 %v102
  %v119 = vcvt.s32.f32 %v103
  %v120 = vcvt.s32.f32 %v104
  %v121 = vcvt.s32.f32 %v105
  %v122 = vcvt.s32.f32 %v106
  %v123 = vcvt.s32.f32 %v107
  %v124 = vcvt.s32.f32 %v108
  %v125 = vld [vmem:[%s1] sm:$0xff]
  %v126 = vld [vmem:[%s1 + $0x8] sm:$0xff]
  %v127 = vld [vmem:[%s1 + $0x10] sm:$0xff]
  %v128 = vld [vmem:[%s1 + $0x18] sm:$0xff]
  %v129 = vld [vmem:[%s1 + $0x20] sm:$0xff]
  %v130 = vld [vmem:[%s1 + $0x28] sm:$0xff]
  %v131 = vld [vmem:[%s1 + $0x30] sm:$0xff]
  %v132 = vld [vmem:[%s1 + $0x38] sm:$0xff]
  %vm133 = vcmask 523264
  %v135 = vsel %vm133, %v109, 0
  %v138 = vsel %vm133, %v110, 0
  %v141 = vsel %vm133, %v111, 0
  %v144 = vsel %vm133, %v112, 0
  %v147 = vsel %vm133, %v113, 0
  %v150 = vsel %vm133, %v114, 0
  %v153 = vsel %vm133, %v115, 0
  %v156 = vsel %vm133, %v116, 0
  %v159 = vsel %vm133, %v117, 0
  %v162 = vsel %vm133, %v118, 0
  %v165 = vsel %vm133, %v119, 0
  %v168 = vsel %vm133, %v120, 0
  %v171 = vsel %vm133, %v121, 0
  %v174 = vsel %vm133, %v122, 0
  %v177 = vsel %vm133, %v123, 0
  %v180 = vsel %vm133, %v124, 0
  %182 = vmatprep.subr.mxu0 0.0
  %v183 = vand.u32 %v125, 4294901760
  %184 = vmatpush1.msra.mxu0 %v183
  %185 = vmatprep.subr.mxu0 0.0
  %v186 = vand.u32 %v126, 4294901760
  %187 = vmatpush1.msra.mxu0 %v186
  %188 = vmatprep.subr.mxu0 0.0
  %v189 = vand.u32 %v127, 4294901760
  %190 = vmatpush1.msra.mxu0 %v189
  %191 = vmatprep.subr.mxu0 0.0
  %v192 = vand.u32 %v128, 4294901760
  %193 = vmatpush1.msra.mxu0 %v192
  %194 = vmatprep.subr.mxu0 0.0
  %v195 = vand.u32 %v129, 4294901760
  %196 = vmatpush1.msra.mxu0 %v195
  %197 = vmatprep.subr.mxu0 0.0
  %v198 = vand.u32 %v130, 4294901760
  %199 = vmatpush1.msra.mxu0 %v198
  %200 = vmatprep.subr.mxu0 0.0
  %v201 = vand.u32 %v131, 4294901760
  %202 = vmatpush1.msra.mxu0 %v201
  %203 = vmatprep.subr.mxu0 0.0
  %v204 = vand.u32 %v132, 4294901760
  %205 = vmatpush1.msra.mxu0 %v204
  %206 = vmatprep.subr.mxu0 0.0
  %207 = vmatpush1.msra.mxu0 0.0
  %208 = vmatprep.subr.mxu0 0.0
  %209 = vmatpush1.msra.mxu0 0.0
  %210 = vmatprep.subr.mxu0 0.0
  %211 = vmatpush1.msra.mxu0 0.0
  %212 = vmatprep.subr.mxu0 0.0
  %213 = vmatpush1.msra.mxu0 0.0
  %214 = vmatprep.subr.mxu0 0.0
  %215 = vmatpush1.msra.mxu0 0.0
  %216 = vmatprep.subr.mxu0 0.0
  %217 = vmatpush1.msra.mxu0 0.0
  %218 = vmatprep.subr.mxu0 0.0
  %219 = vmatpush1.msra.mxu0 0.0
  %220 = vmatprep.subr.mxu0 0.0
  %221 = vmatpush1.msra.mxu0 0.0
  %222 = vmatprep.subr.mxu0 0.0
  %223 = vmatpush1.msra.mxu0 0.0
  %224 = vmatprep.subr.mxu0 0.0
  %225 = vmatpush1.msra.mxu0 0.0
  %226 = vmatprep.subr.mxu0 0.0
  %227 = vmatpush1.msra.mxu0 0.0
  %228 = vmatprep.subr.mxu0 0.0
  %229 = vmatpush1.msra.mxu0 0.0
  %230 = vmatprep.subr.mxu0 0.0
  %231 = vmatpush1.msra.mxu0 0.0
  %232 = vmatprep.subr.mxu0 0.0
  %233 = vmatpush1.msra.mxu0 0.0
  %234 = vmatprep.subr.mxu0 0.0
  %235 = vmatpush1.msra.mxu0 0.0
  %236 = vmatprep.subr.mxu0 0.0
  %237 = vmatpush1.msra.mxu0 0.0
  %238 = vmatprep.subr.mxu0 0.0
  %239 = vmatpush1.msra.mxu0 0.0
  %240 = vmatprep.subr.mxu0 0.0
  %241 = vmatpush1.msra.mxu0 0.0
  %242 = vmatprep.subr.mxu0 0.0
  %243 = vmatpush1.msra.mxu0 0.0
  %244 = vmatprep.subr.mxu0 0.0
  %245 = vmatpush1.msra.mxu0 0.0
  %246 = vmatprep.subr.mxu0 0.0
  %247 = vmatpush1.msra.mxu0 0.0
  %248 = vmatprep.subr.mxu0 0.0
  %249 = vmatpush1.msra.mxu0 0.0
  %250 = vmatprep.subr.mxu0 0.0
  %251 = vmatpush1.msra.mxu0 0.0
  %252 = vmatprep.subr.mxu0 0.0
  %253 = vmatpush1.msra.mxu0 0.0
  %254 = vmatprep.mubr.f32.mxu0 0.0
  %v255 = vand.u32 %v135, 4294901760
  %v256 = vsub.f32 %v135, %v255
  %v257 = vand.u32 %v256, 4294901760
  %v258 = vsub.f32 %v256, %v257
  %v259 = vand.u32 %v258, 4294901760
  %260 = vmatmul.mubr.f32.gmra.mrb[0].mxu0 %v259
  %v261 = vpop.f32.mrb[0].mxu0
  %v262 = vadd.f32 0.0, %v261
  %v263 = vpop.f32.mrb[0].mxu0
  %264 = vmatprep.mubr.f32.mxu0 0.0
  %v265 = vand.u32 %v138, 4294901760
  %v266 = vsub.f32 %v138, %v265
  %v267 = vand.u32 %v266, 4294901760
  %v268 = vsub.f32 %v266, %v267
  %v269 = vand.u32 %v268, 4294901760
  %270 = vmatmul.mubr.f32.gmra.mrb[0].mxu0 %v269
  %v271 = vpop.f32.mrb[0].mxu0
  %v272 = vadd.f32 0.0, %v271
  %v273 = vpop.f32.mrb[0].mxu0
  %274 = vmatprep.mubr.f32.mxu0 0.0
  %v275 = vand.u32 %v141, 4294901760
  %v276 = vsub.f32 %v141, %v275
  %v277 = vand.u32 %v276, 4294901760
  %v278 = vsub.f32 %v276, %v277
  %v279 = vand.u32 %v278, 4294901760
  %280 = vmatmul.mubr.f32.gmra.mrb[0].mxu0 %v279
  %v281 = vpop.f32.mrb[0].mxu0
  %v282 = vadd.f32 0.0, %v281
  %v283 = vpop.f32.mrb[0].mxu0
  %284 = vmatprep.mubr.f32.mxu0 0.0
  %v285 = vand.u32 %v144, 4294901760
  %v286 = vsub.f32 %v144, %v285
  %v287 = vand.u32 %v286, 4294901760
  %v288 = vsub.f32 %v286, %v287
  %v289 = vand.u32 %v288, 4294901760
  %290 = vmatmul.mubr.f32.gmra.mrb[0].mxu0 %v289
  %v291 = vpop.f32.mrb[0].mxu0
  %v292 = vadd.f32 0.0, %v291
  %v293 = vpop.f32.mrb[0].mxu0
  %294 = vmatprep.mubr.f32.mxu0 0.0
  %v295 = vand.u32 %v147, 4294901760
  %v296 = vsub.f32 %v147, %v295
  %v297 = vand.u32 %v296, 4294901760
  %v298 = vsub.f32 %v296, %v297
  %v299 = vand.u32 %v298, 4294901760
  %300 = vmatmul.mubr.f32.gmra.mrb[0].mxu0 %v299
  %v301 = vpop.f32.mrb[0].mxu0
  %v302 = vadd.f32 0.0, %v301
  %v303 = vpop.f32.mrb[0].mxu0
  %304 = vmatprep.mubr.f32.mxu0 0.0
  %v305 = vand.u32 %v150, 4294901760
  %v306 = vsub.f32 %v150, %v305
  %v307 = vand.u32 %v306, 4294901760
  %v308 = vsub.f32 %v306, %v307
  %v309 = vand.u32 %v308, 4294901760
  %310 = vmatmul.mubr.f32.gmra.mrb[0].mxu0 %v309
  %v311 = vpop.f32.mrb[0].mxu0
  %v312 = vadd.f32 0.0, %v311
  %v313 = vpop.f32.mrb[0].mxu0
  %314 = vmatprep.mubr.f32.mxu0 0.0
  %v315 = vand.u32 %v153, 4294901760
  %v316 = vsub.f32 %v153, %v315
  %v317 = vand.u32 %v316, 4294901760
  %v318 = vsub.f32 %v316, %v317
  %v319 = vand.u32 %v318, 4294901760
  %320 = vmatmul.mubr.f32.gmra.mrb[0].mxu0 %v319
  %v321 = vpop.f32.mrb[0].mxu0
  %v322 = vadd.f32 0.0, %v321
  %v323 = vpop.f32.mrb[0].mxu0
  %324 = vmatprep.mubr.f32.mxu0 0.0
  %v325 = vand.u32 %v156, 4294901760
  %v326 = vsub.f32 %v156, %v325
  %v327 = vand.u32 %v326, 4294901760
  %v328 = vsub.f32 %v326, %v327
  %v329 = vand.u32 %v328, 4294901760
  %330 = vmatmul.mubr.f32.gmra.mrb[0].mxu0 %v329
  %v331 = vpop.f32.mrb[0].mxu0
  %v332 = vadd.f32 0.0, %v331
  %v333 = vpop.f32.mrb[0].mxu0
  %334 = vmatprep.mubr.f32.mxu0 0.0
  %v335 = vand.u32 %v159, 4294901760
  %v336 = vsub.f32 %v159, %v335
  %v337 = vand.u32 %v336, 4294901760
  %v338 = vsub.f32 %v336, %v337
  %v339 = vand.u32 %v338, 4294901760
  %340 = vmatmul.mubr.f32.gmra.mrb[0].mxu0 %v339
  %v341 = vpop.f32.mrb[0].mxu0
  %v342 = vadd.f32 0.0, %v341
  %v343 = vpop.f32.mrb[0].mxu0
  %344 = vmatprep.mubr.f32.mxu0 0.0
  %v345 = vand.u32 %v162, 4294901760
  %v346 = vsub.f32 %v162, %v345
  %v347 = vand.u32 %v346, 4294901760
  %v348 = vsub.f32 %v346, %v347
  %v349 = vand.u32 %v348, 4294901760
  %350 = vmatmul.mubr.f32.gmra.mrb[0].mxu0 %v349
  %v351 = vpop.f32.mrb[0].mxu0
  %v352 = vadd.f32 0.0, %v351
  %v353 = vpop.f32.mrb[0].mxu0
  %354 = vmatprep.mubr.f32.mxu0 0.0
  %v355 = vand.u32 %v165, 4294901760
  %v356 = vsub.f32 %v165, %v355
  %v357 = vand.u32 %v356, 4294901760
  %v358 = vsub.f32 %v356, %v357
  %v359 = vand.u32 %v358, 4294901760
  %360 = vmatmul.mubr.f32.gmra.mrb[0].mxu0 %v359
  %v361 = vpop.f32.mrb[0].mxu0
  %v362 = vadd.f32 0.0, %v361
  %v363 = vpop.f32.mrb[0].mxu0
  %364 = vmatprep.mubr.f32.mxu0 0.0
  %v365 = vand.u32 %v168, 4294901760
  %v366 = vsub.f32 %v168, %v365
  %v367 = vand.u32 %v366, 4294901760
  %v368 = vsub.f32 %v366, %v367
  %v369 = vand.u32 %v368, 4294901760
  %370 = vmatmul.mubr.f32.gmra.mrb[0].mxu0 %v369
  %v371 = vpop.f32.mrb[0].mxu0
  %v372 = vadd.f32 0.0, %v371
  %v373 = vpop.f32.mrb[0].mxu0
  %374 = vmatprep.mubr.f32.mxu0 0.0
  %v375 = vand.u32 %v171, 4294901760
  %v376 = vsub.f32 %v171, %v375
  %v377 = vand.u32 %v376, 4294901760
  %v378 = vsub.f32 %v376, %v377
  %v379 = vand.u32 %v378, 4294901760
  %380 = vmatmul.mubr.f32.gmra.mrb[0].mxu0 %v379
  %v381 = vpop.f32.mrb[0].mxu0
  %v382 = vadd.f32 0.0, %v381
  %v383 = vpop.f32.mrb[0].mxu0
  %384 = vmatprep.mubr.f32.mxu0 0.0
  %v385 = vand.u32 %v174, 4294901760
  %v386 = vsub.f32 %v174, %v385
  %v387 = vand.u32 %v386, 4294901760
  %v388 = vsub.f32 %v386, %v387
  %v389 = vand.u32 %v388, 4294901760
  %390 = vmatmul.mubr.f32.gmra.mrb[0].mxu0 %v389
  %v391 = vpop.f32.mrb[0].mxu0
  %v392 = vadd.f32 0.0, %v391
  %v393 = vpop.f32.mrb[0].mxu0
  %394 = vmatprep.mubr.f32.mxu0 0.0
  %v395 = vand.u32 %v177, 4294901760
  %v396 = vsub.f32 %v177, %v395
  %v397 = vand.u32 %v396, 4294901760
  %v398 = vsub.f32 %v396, %v397
  %v399 = vand.u32 %v398, 4294901760
  %400 = vmatmul.mubr.f32.gmra.mrb[0].mxu0 %v399
  %v401 = vpop.f32.mrb[0].mxu0
  %v402 = vadd.f32 0.0, %v401
  %v403 = vpop.f32.mrb[0].mxu0
  %404 = vmatprep.mubr.f32.mxu0 0.0
  %v405 = vand.u32 %v180, 4294901760
  %v406 = vsub.f32 %v180, %v405
  %v407 = vand.u32 %v406, 4294901760
  %v408 = vsub.f32 %v406, %v407
  %v409 = vand.u32 %v408, 4294901760
  %410 = vmatmul.mubr.f32.gmra.mrb[0].mxu0 %v409
  %v411 = vpop.f32.mrb[0].mxu0
  %v412 = vadd.f32 0.0, %v411
  %v413 = vpop.f32.mrb[0].mxu0
  %414 = vdwg.mxu0
  %415 = vmatprep.subr.mxu0 0.0
  %v416 = vand.u32 %v125, 4294901760
  %v417 = vsub.f32 %v125, %v416
  %v418 = vand.u32 %v417, 4294901760
  %v419 = vsub.f32 %v417, %v418
  %v420 = vand.u32 %v419, 4294901760
  %421 = vmatpush1.msra.mxu0 %v420
  %422 = vmatprep.subr.mxu0 0.0
  %v423 = vand.u32 %v126, 4294901760
  %v424 = vsub.f32 %v126, %v423
  %v425 = vand.u32 %v424, 4294901760
  %v426 = vsub.f32 %v424, %v425
  %v427 = vand.u32 %v426, 4294901760
  %428 = vmatpush1.msra.mxu0 %v427
  %429 = vmatprep.subr.mxu0 0.0
  %v430 = vand.u32 %v127, 4294901760
  %v431 = vsub.f32 %v127, %v430
  %v432 = vand.u32 %v431, 4294901760
  %v433 = vsub.f32 %v431, %v432
  %v434 = vand.u32 %v433, 4294901760
  %435 = vmatpush1.msra.mxu0 %v434
  %436 = vmatprep.subr.mxu0 0.0
  %v437 = vand.u32 %v128, 4294901760
  %v438 = vsub.f32 %v128, %v437
  %v439 = vand.u32 %v438, 4294901760
  %v440 = vsub.f32 %v438, %v439
  %v441 = vand.u32 %v440, 4294901760
  %442 = vmatpush1.msra.mxu0 %v441
  %443 = vmatprep.subr.mxu0 0.0
  %v444 = vand.u32 %v129, 4294901760
  %v445 = vsub.f32 %v129, %v444
  %v446 = vand.u32 %v445, 4294901760
  %v447 = vsub.f32 %v445, %v446
  %v448 = vand.u32 %v447, 4294901760
  %449 = vmatpush1.msra.mxu0 %v448
  %450 = vmatprep.subr.mxu0 0.0
  %v451 = vand.u32 %v130, 4294901760
  %v452 = vsub.f32 %v130, %v451
  %v453 = vand.u32 %v452, 4294901760
  %v454 = vsub.f32 %v452, %v453
  %v455 = vand.u32 %v454, 4294901760
  %456 = vmatpush1.msra.mxu0 %v455
  %457 = vmatprep.subr.mxu0 0.0
  %v458 = vand.u32 %v131, 4294901760
  %v459 = vsub.f32 %v131, %v458
  %v460 = vand.u32 %v459, 4294901760
  %v461 = vsub.f32 %v459, %v460
  %v462 = vand.u32 %v461, 4294901760
  %463 = vmatpush1.msra.mxu0 %v462
  %464 = vmatprep.subr.mxu0 0.0
  %v465 = vand.u32 %v132, 4294901760
  %v466 = vsub.f32 %v132, %v465
  %v467 = vand.u32 %v466, 4294901760
  %v468 = vsub.f32 %v466, %v467
  %v469 = vand.u32 %v468, 4294901760
  %470 = vmatpush1.msra.mxu0 %v469
  %471 = vmatprep.subr.mxu0 0.0
  %472 = vmatpush1.msra.mxu0 0.0
  %473 = vmatprep.subr.mxu0 0.0
  %474 = vmatpush1.msra.mxu0 0.0
  %475 = vmatprep.subr.mxu0 0.0
  %476 = vmatpush1.msra.mxu0 0.0
  %477 = vmatprep.subr.mxu0 0.0
  %478 = vmatpush1.msra.mxu0 0.0
  %479 = vmatprep.subr.mxu0 0.0
  %480 = vmatpush1.msra.mxu0 0.0
  %481 = vmatprep.subr.mxu0 0.0
  %482 = vmatpush1.msra.mxu0 0.0
  %483 = vmatprep.subr.mxu0 0.0
  %484 = vmatpush1.msra.mxu0 0.0
  %485 = vmatprep.subr.mxu0 0.0
  %486 = vmatpush1.msra.mxu0 0.0
  %487 = vmatprep.subr.mxu0 0.0
  %488 = vmatpush1.msra.mxu0 0.0
  %489 = vmatprep.subr.mxu0 0.0
  %490 = vmatpush1.msra.mxu0 0.0
  %491 = vmatprep.subr.mxu0 0.0
  %492 = vmatpush1.msra.mxu0 0.0
  %493 = vmatprep.subr.mxu0 0.0
  %494 = vmatpush1.msra.mxu0 0.0
  %495 = vmatprep.subr.mxu0 0.0
  %496 = vmatpush1.msra.mxu0 0.0
  %497 = vmatprep.subr.mxu0 0.0
  %498 = vmatpush1.msra.mxu0 0.0
  %499 = vmatprep.subr.mxu0 0.0
  %500 = vmatpush1.msra.mxu0 0.0
  %501 = vmatprep.subr.mxu0 0.0
  %502 = vmatpush1.msra.mxu0 0.0
  %503 = vmatprep.subr.mxu0 0.0
  %504 = vmatpush1.msra.mxu0 0.0
  %505 = vmatprep.subr.mxu0 0.0
  %506 = vmatpush1.msra.mxu0 0.0
  %507 = vmatprep.subr.mxu0 0.0
  %508 = vmatpush1.msra.mxu0 0.0
  %509 = vmatprep.subr.mxu0 0.0
  %510 = vmatpush1.msra.mxu0 0.0
  %511 = vmatprep.subr.mxu0 0.0
  %512 = vmatpush1.msra.mxu0 0.0
  %513 = vmatprep.subr.mxu0 0.0
  %514 = vmatpush1.msra.mxu0 0.0
  %515 = vmatprep.subr.mxu0 0.0
  %516 = vmatpush1.msra.mxu0 0.0
  %517 = vmatprep.subr.mxu0 0.0
  %518 = vmatpush1.msra.mxu0 0.0
  %519 = vmatprep.mubr.f32.mxu0 0.0
  %v520 = vand.u32 %v135, 4294901760
  %521 = vmatmul.mubr.f32.gmra.mrb[0].mxu0 %v520
  %v522 = vpop.f32.mrb[0].mxu0
  %v523 = vadd.f32 %v262, %v522
  %v524 = vpop.f32.mrb[0].mxu0
  %525 = vmatprep.mubr.f32.mxu0 0.0
  %v526 = vand.u32 %v138, 4294901760
  %527 = vmatmul.mubr.f32.gmra.mrb[0].mxu0 %v526
  %v528 = vpop.f32.mrb[0].mxu0
  %v529 = vadd.f32 %v272, %v528
  %v530 = vpop.f32.mrb[0].mxu0
  %531 = vmatprep.mubr.f32.mxu0 0.0
  %v532 = vand.u32 %v141, 4294901760
  %533 = vmatmul.mubr.f32.gmra.mrb[0].mxu0 %v532
  %v534 = vpop.f32.mrb[0].mxu0
  %v535 = vadd.f32 %v282, %v534
  %v536 = vpop.f32.mrb[0].mxu0
  %537 = vmatprep.mubr.f32.mxu0 0.0
  %v538 = vand.u32 %v144, 4294901760
  %539 = vmatmul.mubr.f32.gmra.mrb[0].mxu0 %v538
  %v540 = vpop.f32.mrb[0].mxu0
  %v541 = vadd.f32 %v292, %v540
  %v542 = vpop.f32.mrb[0].mxu0
  %543 = vmatprep.mubr.f32.mxu0 0.0
  %v544 = vand.u32 %v147, 4294901760
  %545 = vmatmul.mubr.f32.gmra.mrb[0].mxu0 %v544
  %v546 = vpop.f32.mrb[0].mxu0
  %v547 = vadd.f32 %v302, %v546
  %v548 = vpop.f32.mrb[0].mxu0
  %549 = vmatprep.mubr.f32.mxu0 0.0
  %v550 = vand.u32 %v150, 4294901760
  %551 = vmatmul.mubr.f32.gmra.mrb[0].mxu0 %v550
  %v552 = vpop.f32.mrb[0].mxu0
  %v553 = vadd.f32 %v312, %v552
  %v554 = vpop.f32.mrb[0].mxu0
  %555 = vmatprep.mubr.f32.mxu0 0.0
  %v556 = vand.u32 %v153, 4294901760
  %557 = vmatmul.mubr.f32.gmra.mrb[0].mxu0 %v556
  %v558 = vpop.f32.mrb[0].mxu0
  %v559 = vadd.f32 %v322, %v558
  %v560 = vpop.f32.mrb[0].mxu0
  %561 = vmatprep.mubr.f32.mxu0 0.0
  %v562 = vand.u32 %v156, 4294901760
  %563 = vmatmul.mubr.f32.gmra.mrb[0].mxu0 %v562
  %v564 = vpop.f32.mrb[0].mxu0
  %v565 = vadd.f32 %v332, %v564
  %v566 = vpop.f32.mrb[0].mxu0
  %567 = vmatprep.mubr.f32.mxu0 0.0
  %v568 = vand.u32 %v159, 4294901760
  %569 = vmatmul.mubr.f32.gmra.mrb[0].mxu0 %v568
  %v570 = vpop.f32.mrb[0].mxu0
  %v571 = vadd.f32 %v342, %v570
  %v572 = vpop.f32.mrb[0].mxu0
  %573 = vmatprep.mubr.f32.mxu0 0.0
  %v574 = vand.u32 %v162, 4294901760
  %575 = vmatmul.mubr.f32.gmra.mrb[0].mxu0 %v574
  %v576 = vpop.f32.mrb[0].mxu0
  %v577 = vadd.f32 %v352, %v576
  %v578 = vpop.f32.mrb[0].mxu0
  %579 = vmatprep.mubr.f32.mxu0 0.0
  %v580 = vand.u32 %v165, 4294901760
  %581 = vmatmul.mubr.f32.gmra.mrb[0].mxu0 %v580
  %v582 = vpop.f32.mrb[0].mxu0
  %v583 = vadd.f32 %v362, %v582
  %v584 = vpop.f32.mrb[0].mxu0
  %585 = vmatprep.mubr.f32.mxu0 0.0
  %v586 = vand.u32 %v168, 4294901760
  %587 = vmatmul.mubr.f32.gmra.mrb[0].mxu0 %v586
  %v588 = vpop.f32.mrb[0].mxu0
  %v589 = vadd.f32 %v372, %v588
  %v590 = vpop.f32.mrb[0].mxu0
  %591 = vmatprep.mubr.f32.mxu0 0.0
  %v592 = vand.u32 %v171, 4294901760
  %593 = vmatmul.mubr.f32.gmra.mrb[0].mxu0 %v592
  %v594 = vpop.f32.mrb[0].mxu0
  %v595 = vadd.f32 %v382, %v594
  %v596 = vpop.f32.mrb[0].mxu0
  %597 = vmatprep.mubr.f32.mxu0 0.0
  %v598 = vand.u32 %v174, 4294901760
  %599 = vmatmul.mubr.f32.gmra.mrb[0].mxu0 %v598
  %v600 = vpop.f32.mrb[0].mxu0
  %v601 = vadd.f32 %v392, %v600
  %v602 = vpop.f32.mrb[0].mxu0
  %603 = vmatprep.mubr.f32.mxu0 0.0
  %v604 = vand.u32 %v177, 4294901760
  %605 = vmatmul.mubr.f32.gmra.mrb[0].mxu0 %v604
  %v606 = vpop.f32.mrb[0].mxu0
  %v607 = vadd.f32 %v402, %v606
  %v608 = vpop.f32.mrb[0].mxu0
  %609 = vmatprep.mubr.f32.mxu0 0.0
  %v610 = vand.u32 %v180, 4294901760
  %611 = vmatmul.mubr.f32.gmra.mrb[0].mxu0 %v610
  %v612 = vpop.f32.mrb[0].mxu0
  %v613 = vadd.f32 %v412, %v612
  %v614 = vpop.f32.mrb[0].mxu0
  %615 = vdwg.mxu0
  %616 = vmatprep.subr.mxu0 0.0
  %v617 = vand.u32 %v125, 4294901760
  %v618 = vsub.f32 %v125, %v617
  %619 = vmatpush1.msra.mxu0 %v618
  %620 = vmatprep.subr.mxu0 0.0
  %v621 = vand.u32 %v126, 4294901760
  %v622 = vsub.f32 %v126, %v621
  %623 = vmatpush1.msra.mxu0 %v622
  %624 = vmatprep.subr.mxu0 0.0
  %v625 = vand.u32 %v127, 4294901760
  %v626 = vsub.f32 %v127, %v625
  %627 = vmatpush1.msra.mxu0 %v626
  %628 = vmatprep.subr.mxu0 0.0
  %v629 = vand.u32 %v128, 4294901760
  %v630 = vsub.f32 %v128, %v629
  %631 = vmatpush1.msra.mxu0 %v630
  %632 = vmatprep.subr.mxu0 0.0
  %v633 = vand.u32 %v129, 4294901760
  %v634 = vsub.f32 %v129, %v633
  %635 = vmatpush1.msra.mxu0 %v634
  %636 = vmatprep.subr.mxu0 0.0
  %v637 = vand.u32 %v130, 4294901760
  %v638 = vsub.f32 %v130, %v637
  %639 = vmatpush1.msra.mxu0 %v638
  %640 = vmatprep.subr.mxu0 0.0
  %v641 = vand.u32 %v131, 4294901760
  %v642 = vsub.f32 %v131, %v641
  %643 = vmatpush1.msra.mxu0 %v642
  %644 = vmatprep.subr.mxu0 0.0
  %v645 = vand.u32 %v132, 4294901760
  %v646 = vsub.f32 %v132, %v645
  %647 = vmatpush1.msra.mxu0 %v646
  %648 = vmatprep.subr.mxu0 0.0
  %649 = vmatpush1.msra.mxu0 0.0
  %650 = vmatprep.subr.mxu0 0.0
  %651 = vmatpush1.msra.mxu0 0.0
  %652 = vmatprep.subr.mxu0 0.0
  %653 = vmatpush1.msra.mxu0 0.0
  %654 = vmatprep.subr.mxu0 0.0
  %655 = vmatpush1.msra.mxu0 0.0
  %656 = vmatprep.subr.mxu0 0.0
  %657 = vmatpush1.msra.mxu0 0.0
  %658 = vmatprep.subr.mxu0 0.0
  %659 = vmatpush1.msra.mxu0 0.0
  %660 = vmatprep.subr.mxu0 0.0
  %661 = vmatpush1.msra.mxu0 0.0
  %662 = vmatprep.subr.mxu0 0.0
  %663 = vmatpush1.msra.mxu0 0.0
  %664 = vmatprep.subr.mxu0 0.0
  %665 = vmatpush1.msra.mxu0 0.0
  %666 = vmatprep.subr.mxu0 0.0
  %667 = vmatpush1.msra.mxu0 0.0
  %668 = vmatprep.subr.mxu0 0.0
  %669 = vmatpush1.msra.mxu0 0.0
  %670 = vmatprep.subr.mxu0 0.0
  %671 = vmatpush1.msra.mxu0 0.0
  %672 = vmatprep.subr.mxu0 0.0
  %673 = vmatpush1.msra.mxu0 0.0
  %674 = vmatprep.subr.mxu0 0.0
  %675 = vmatpush1.msra.mxu0 0.0
  %676 = vmatprep.subr.mxu0 0.0
  %677 = vmatpush1.msra.mxu0 0.0
  %678 = vmatprep.subr.mxu0 0.0
  %679 = vmatpush1.msra.mxu0 0.0
  %680 = vmatprep.subr.mxu0 0.0
  %681 = vmatpush1.msra.mxu0 0.0
  %682 = vmatprep.subr.mxu0 0.0
  %683 = vmatpush1.msra.mxu0 0.0
  %684 = vmatprep.subr.mxu0 0.0
  %685 = vmatpush1.msra.mxu0 0.0
  %686 = vmatprep.subr.mxu0 0.0
  %687 = vmatpush1.msra.mxu0 0.0
  %688 = vmatprep.subr.mxu0 0.0
  %689 = vmatpush1.msra.mxu0 0.0
  %690 = vmatprep.subr.mxu0 0.0
  %691 = vmatpush1.msra.mxu0 0.0
  %692 = vmatprep.subr.mxu0 0.0
  %693 = vmatpush1.msra.mxu0 0.0
  %694 = vmatprep.subr.mxu0 0.0
  %695 = vmatpush1.msra.mxu0 0.0
  %696 = vmatprep.mubr.f32.mxu0 0.0
  %v697 = vand.u32 %v135, 4294901760
  %v698 = vsub.f32 %v135, %v697
  %699 = vmatmul.mubr.f32.gmra.mrb[0].mxu0 %v698
  %v700 = vpop.f32.mrb[0].mxu0
  %v701 = vadd.f32 %v523, %v700
  %v702 = vpop.f32.mrb[0].mxu0
  %703 = vmatprep.mubr.f32.mxu0 0.0
  %v704 = vand.u32 %v138, 4294901760
  %v705 = vsub.f32 %v138, %v704
  %706 = vmatmul.mubr.f32.gmra.mrb[0].mxu0 %v705
  %v707 = vpop.f32.mrb[0].mxu0
  %v708 = vadd.f32 %v529, %v707
  %v709 = vpop.f32.mrb[0].mxu0
  %710 = vmatprep.mubr.f32.mxu0 0.0
  %v711 = vand.u32 %v141, 4294901760
  %v712 = vsub.f32 %v141, %v711
  %713 = vmatmul.mubr.f32.gmra.mrb[0].mxu0 %v712
  %v714 = vpop.f32.mrb[0].mxu0
  %v715 = vadd.f32 %v535, %v714
  %v716 = vpop.f32.mrb[0].mxu0
  %717 = vmatprep.mubr.f32.mxu0 0.0
  %v718 = vand.u32 %v144, 4294901760
  %v719 = vsub.f32 %v144, %v718
  %720 = vmatmul.mubr.f32.gmra.mrb[0].mxu0 %v719
  %v721 = vpop.f32.mrb[0].mxu0
  %v722 = vadd.f32 %v541, %v721
  %v723 = vpop.f32.mrb[0].mxu0
  %724 = vmatprep.mubr.f32.mxu0 0.0
  %v725 = vand.u32 %v147, 4294901760
  %v726 = vsub.f32 %v147, %v725
  %727 = vmatmul.mubr.f32.gmra.mrb[0].mxu0 %v726
  %v728 = vpop.f32.mrb[0].mxu0
  %v729 = vadd.f32 %v547, %v728
  %v730 = vpop.f32.mrb[0].mxu0
  %731 = vmatprep.mubr.f32.mxu0 0.0
  %v732 = vand.u32 %v150, 4294901760
  %v733 = vsub.f32 %v150, %v732
  %734 = vmatmul.mubr.f32.gmra.mrb[0].mxu0 %v733
  %v735 = vpop.f32.mrb[0].mxu0
  %v736 = vadd.f32 %v553, %v735
  %v737 = vpop.f32.mrb[0].mxu0
  %738 = vmatprep.mubr.f32.mxu0 0.0
  %v739 = vand.u32 %v153, 4294901760
  %v740 = vsub.f32 %v153, %v739
  %741 = vmatmul.mubr.f32.gmra.mrb[0].mxu0 %v740
  %v742 = vpop.f32.mrb[0].mxu0
  %v743 = vadd.f32 %v559, %v742
  %v744 = vpop.f32.mrb[0].mxu0
  %745 = vmatprep.mubr.f32.mxu0 0.0
  %v746 = vand.u32 %v156, 4294901760
  %v747 = vsub.f32 %v156, %v746
  %748 = vmatmul.mubr.f32.gmra.mrb[0].mxu0 %v747
  %v749 = vpop.f32.mrb[0].mxu0
  %v750 = vadd.f32 %v565, %v749
  %v751 = vpop.f32.mrb[0].mxu0
  %752 = vmatprep.mubr.f32.mxu0 0.0
  %v753 = vand.u32 %v159, 4294901760
  %v754 = vsub.f32 %v159, %v753
  %755 = vmatmul.mubr.f32.gmra.mrb[0].mxu0 %v754
  %v756 = vpop.f32.mrb[0].mxu0
  %v757 = vadd.f32 %v571, %v756
  %v758 = vpop.f32.mrb[0].mxu0
  %759 = vmatprep.mubr.f32.mxu0 0.0
  %v760 = vand.u32 %v162, 4294901760
  %v761 = vsub.f32 %v162, %v760
  %762 = vmatmul.mubr.f32.gmra.mrb[0].mxu0 %v761
  %v763 = vpop.f32.mrb[0].mxu0
  %v764 = vadd.f32 %v577, %v763
  %v765 = vpop.f32.mrb[0].mxu0
  %766 = vmatprep.mubr.f32.mxu0 0.0
  %v767 = vand.u32 %v165, 4294901760
  %v768 = vsub.f32 %v165, %v767
  %769 = vmatmul.mubr.f32.gmra.mrb[0].mxu0 %v768
  %v770 = vpop.f32.mrb[0].mxu0
  %v771 = vadd.f32 %v583, %v770
  %v772 = vpop.f32.mrb[0].mxu0
  %773 = vmatprep.mubr.f32.mxu0 0.0
  %v774 = vand.u32 %v168, 4294901760
  %v775 = vsub.f32 %v168, %v774
  %776 = vmatmul.mubr.f32.gmra.mrb[0].mxu0 %v775
  %v777 = vpop.f32.mrb[0].mxu0
  %v778 = vadd.f32 %v589, %v777
  %v779 = vpop.f32.mrb[0].mxu0
  %780 = vmatprep.mubr.f32.mxu0 0.0
  %v781 = vand.u32 %v171, 4294901760
  %v782 = vsub.f32 %v171, %v781
  %783 = vmatmul.mubr.f32.gmra.mrb[0].mxu0 %v782
  %v784 = vpop.f32.mrb[0].mxu0
  %v785 = vadd.f32 %v595, %v784
  %v786 = vpop.f32.mrb[0].mxu0
  %787 = vmatprep.mubr.f32.mxu0 0.0
  %v788 = vand.u32 %v174, 4294901760
  %v789 = vsub.f32 %v174, %v788
  %790 = vmatmul.mubr.f32.gmra.mrb[0].mxu0 %v789
  %v791 = vpop.f32.mrb[0].mxu0
  %v792 = vadd.f32 %v601, %v791
  %v793 = vpop.f32.mrb[0].mxu0
  %794 = vmatprep.mubr.f32.mxu0 0.0
  %v795 = vand.u32 %v177, 4294901760
  %v796 = vsub.f32 %v177, %v795
  %797 = vmatmul.mubr.f32.gmra.mrb[0].mxu0 %v796
  %v798 = vpop.f32.mrb[0].mxu0
  %v799 = vadd.f32 %v607, %v798
  %v800 = vpop.f32.mrb[0].mxu0
  %801 = vmatprep.mubr.f32.mxu0 0.0
  %v802 = vand.u32 %v180, 4294901760
  %v803 = vsub.f32 %v180, %v802
  %804 = vmatmul.mubr.f32.gmra.mrb[0].mxu0 %v803
  %v805 = vpop.f32.mrb[0].mxu0
  %v806 = vadd.f32 %v613, %v805
  %v807 = vpop.f32.mrb[0].mxu0
  %808 = vdwg.mxu0
  %809 = vmatprep.subr.mxu0 0.0
  %v810 = vand.u32 %v125, 4294901760
  %811 = vmatpush1.msra.mxu0 %v810
  %812 = vmatprep.subr.mxu0 0.0
  %v813 = vand.u32 %v126, 4294901760
  %814 = vmatpush1.msra.mxu0 %v813
  %815 = vmatprep.subr.mxu0 0.0
  %v816 = vand.u32 %v127, 4294901760
  %817 = vmatpush1.msra.mxu0 %v816
  %818 = vmatprep.subr.mxu0 0.0
  %v819 = vand.u32 %v128, 4294901760
  %820 = vmatpush1.msra.mxu0 %v819
  %821 = vmatprep.subr.mxu0 0.0
  %v822 = vand.u32 %v129, 4294901760
  %823 = vmatpush1.msra.mxu0 %v822
  %824 = vmatprep.subr.mxu0 0.0
  %v825 = vand.u32 %v130, 4294901760
  %826 = vmatpush1.msra.mxu0 %v825
  %827 = vmatprep.subr.mxu0 0.0
  %v828 = vand.u32 %v131, 4294901760
  %829 = vmatpush1.msra.mxu0 %v828
  %830 = vmatprep.subr.mxu0 0.0
  %v831 = vand.u32 %v132, 4294901760
  %832 = vmatpush1.msra.mxu0 %v831
  %833 = vmatprep.subr.mxu0 0.0
  %834 = vmatpush1.msra.mxu0 0.0
  %835 = vmatprep.subr.mxu0 0.0
  %836 = vmatpush1.msra.mxu0 0.0
  %837 = vmatprep.subr.mxu0 0.0
  %838 = vmatpush1.msra.mxu0 0.0
  %839 = vmatprep.subr.mxu0 0.0
  %840 = vmatpush1.msra.mxu0 0.0
  %841 = vmatprep.subr.mxu0 0.0
  %842 = vmatpush1.msra.mxu0 0.0
  %843 = vmatprep.subr.mxu0 0.0
  %844 = vmatpush1.msra.mxu0 0.0
  %845 = vmatprep.subr.mxu0 0.0
  %846 = vmatpush1.msra.mxu0 0.0
  %847 = vmatprep.subr.mxu0 0.0
  %848 = vmatpush1.msra.mxu0 0.0
  %849 = vmatprep.subr.mxu0 0.0
  %850 = vmatpush1.msra.mxu0 0.0
  %851 = vmatprep.subr.mxu0 0.0
  %852 = vmatpush1.msra.mxu0 0.0
  %853 = vmatprep.subr.mxu0 0.0
  %854 = vmatpush1.msra.mxu0 0.0
  %855 = vmatprep.subr.mxu0 0.0
  %856 = vmatpush1.msra.mxu0 0.0
  %857 = vmatprep.subr.mxu0 0.0
  %858 = vmatpush1.msra.mxu0 0.0
  %859 = vmatprep.subr.mxu0 0.0
  %860 = vmatpush1.msra.mxu0 0.0
  %861 = vmatprep.subr.mxu0 0.0
  %862 = vmatpush1.msra.mxu0 0.0
  %863 = vmatprep.subr.mxu0 0.0
  %864 = vmatpush1.msra.mxu0 0.0
  %865 = vmatprep.subr.mxu0 0.0
  %866 = vmatpush1.msra.mxu0 0.0
  %867 = vmatprep.subr.mxu0 0.0
  %868 = vmatpush1.msra.mxu0 0.0
  %869 = vmatprep.subr.mxu0 0.0
  %870 = vmatpush1.msra.mxu0 0.0
  %871 = vmatprep.subr.mxu0 0.0
  %872 = vmatpush1.msra.mxu0 0.0
  %873 = vmatprep.subr.mxu0 0.0
  %874 = vmatpush1.msra.mxu0 0.0
  %875 = vmatprep.subr.mxu0 0.0
  %876 = vmatpush1.msra.mxu0 0.0
  %877 = vmatprep.subr.mxu0 0.0
  %878 = vmatpush1.msra.mxu0 0.0
  %879 = vmatprep.subr.mxu0 0.0
  %880 = vmatpush1.msra.mxu0 0.0
  %881 = vmatprep.mubr.f32.mxu0 0.0
  %v882 = vand.u32 %v135, 4294901760
  %v883 = vsub.f32 %v135, %v882
  %v884 = vand.u32 %v883, 4294901760
  %885 = vmatmul.mubr.f32.gmra.mrb[0].mxu0 %v884
  %v886 = vpop.f32.mrb[0].mxu0
  %v887 = vadd.f32 %v701, %v886
  %v888 = vpop.f32.mrb[0].mxu0
  %889 = vmatprep.mubr.f32.mxu0 0.0
  %v890 = vand.u32 %v138, 4294901760
  %v891 = vsub.f32 %v138, %v890
  %v892 = vand.u32 %v891, 4294901760
  %893 = vmatmul.mubr.f32.gmra.mrb[0].mxu0 %v892
  %v894 = vpop.f32.mrb[0].mxu0
  %v895 = vadd.f32 %v708, %v894
  %v896 = vpop.f32.mrb[0].mxu0
  %897 = vmatprep.mubr.f32.mxu0 0.0
  %v898 = vand.u32 %v141, 4294901760
  %v899 = vsub.f32 %v141, %v898
  %v900 = vand.u32 %v899, 4294901760
  %901 = vmatmul.mubr.f32.gmra.mrb[0].mxu0 %v900
  %v902 = vpop.f32.mrb[0].mxu0
  %v903 = vadd.f32 %v715, %v902
  %v904 = vpop.f32.mrb[0].mxu0
  %905 = vmatprep.mubr.f32.mxu0 0.0
  %v906 = vand.u32 %v144, 4294901760
  %v907 = vsub.f32 %v144, %v906
  %v908 = vand.u32 %v907, 4294901760
  %909 = vmatmul.mubr.f32.gmra.mrb[0].mxu0 %v908
  %v910 = vpop.f32.mrb[0].mxu0
  %v911 = vadd.f32 %v722, %v910
  %v912 = vpop.f32.mrb[0].mxu0
  %913 = vmatprep.mubr.f32.mxu0 0.0
  %v914 = vand.u32 %v147, 4294901760
  %v915 = vsub.f32 %v147, %v914
  %v916 = vand.u32 %v915, 4294901760
  %917 = vmatmul.mubr.f32.gmra.mrb[0].mxu0 %v916
  %v918 = vpop.f32.mrb[0].mxu0
  %v919 = vadd.f32 %v729, %v918
  %v920 = vpop.f32.mrb[0].mxu0
  %921 = vmatprep.mubr.f32.mxu0 0.0
  %v922 = vand.u32 %v150, 4294901760
  %v923 = vsub.f32 %v150, %v922
  %v924 = vand.u32 %v923, 4294901760
  %925 = vmatmul.mubr.f32.gmra.mrb[0].mxu0 %v924
  %v926 = vpop.f32.mrb[0].mxu0
  %v927 = vadd.f32 %v736, %v926
  %v928 = vpop.f32.mrb[0].mxu0
  %929 = vmatprep.mubr.f32.mxu0 0.0
  %v930 = vand.u32 %v153, 4294901760
  %v931 = vsub.f32 %v153, %v930
  %v932 = vand.u32 %v931, 4294901760
  %933 = vmatmul.mubr.f32.gmra.mrb[0].mxu0 %v932
  %v934 = vpop.f32.mrb[0].mxu0
  %v935 = vadd.f32 %v743, %v934
  %v936 = vpop.f32.mrb[0].mxu0
  %937 = vmatprep.mubr.f32.mxu0 0.0
  %v938 = vand.u32 %v156, 4294901760
  %v939 = vsub.f32 %v156, %v938
  %v940 = vand.u32 %v939, 4294901760
  %941 = vmatmul.mubr.f32.gmra.mrb[0].mxu0 %v940
  %v942 = vpop.f32.mrb[0].mxu0
  %v943 = vadd.f32 %v750, %v942
  %v944 = vpop.f32.mrb[0].mxu0
  %945 = vmatprep.mubr.f32.mxu0 0.0
  %v946 = vand.u32 %v159, 4294901760
  %v947 = vsub.f32 %v159, %v946
  %v948 = vand.u32 %v947, 4294901760
  %949 = vmatmul.mubr.f32.gmra.mrb[0].mxu0 %v948
  %v950 = vpop.f32.mrb[0].mxu0
  %v951 = vadd.f32 %v757, %v950
  %v952 = vpop.f32.mrb[0].mxu0
  %953 = vmatprep.mubr.f32.mxu0 0.0
  %v954 = vand.u32 %v162, 4294901760
  %v955 = vsub.f32 %v162, %v954
  %v956 = vand.u32 %v955, 4294901760
  %957 = vmatmul.mubr.f32.gmra.mrb[0].mxu0 %v956
  %v958 = vpop.f32.mrb[0].mxu0
  %v959 = vadd.f32 %v764, %v958
  %v960 = vpop.f32.mrb[0].mxu0
  %961 = vmatprep.mubr.f32.mxu0 0.0
  %v962 = vand.u32 %v165, 4294901760
  %v963 = vsub.f32 %v165, %v962
  %v964 = vand.u32 %v963, 4294901760
  %965 = vmatmul.mubr.f32.gmra.mrb[0].mxu0 %v964
  %v966 = vpop.f32.mrb[0].mxu0
  %v967 = vadd.f32 %v771, %v966
  %v968 = vpop.f32.mrb[0].mxu0
  %969 = vmatprep.mubr.f32.mxu0 0.0
  %v970 = vand.u32 %v168, 4294901760
  %v971 = vsub.f32 %v168, %v970
  %v972 = vand.u32 %v971, 4294901760
  %973 = vmatmul.mubr.f32.gmra.mrb[0].mxu0 %v972
  %v974 = vpop.f32.mrb[0].mxu0
  %v975 = vadd.f32 %v778, %v974
  %v976 = vpop.f32.mrb[0].mxu0
  %977 = vmatprep.mubr.f32.mxu0 0.0
  %v978 = vand.u32 %v171, 4294901760
  %v979 = vsub.f32 %v171, %v978
  %v980 = vand.u32 %v979, 4294901760
  %981 = vmatmul.mubr.f32.gmra.mrb[0].mxu0 %v980
  %v982 = vpop.f32.mrb[0].mxu0
  %v983 = vadd.f32 %v785, %v982
  %v984 = vpop.f32.mrb[0].mxu0
  %985 = vmatprep.mubr.f32.mxu0 0.0
  %v986 = vand.u32 %v174, 4294901760
  %v987 = vsub.f32 %v174, %v986
  %v988 = vand.u32 %v987, 4294901760
  %989 = vmatmul.mubr.f32.gmra.mrb[0].mxu0 %v988
  %v990 = vpop.f32.mrb[0].mxu0
  %v991 = vadd.f32 %v792, %v990
  %v992 = vpop.f32.mrb[0].mxu0
  %993 = vmatprep.mubr.f32.mxu0 0.0
  %v994 = vand.u32 %v177, 4294901760
  %v995 = vsub.f32 %v177, %v994
  %v996 = vand.u32 %v995, 4294901760
  %997 = vmatmul.mubr.f32.gmra.mrb[0].mxu0 %v996
  %v998 = vpop.f32.mrb[0].mxu0
  %v999 = vadd.f32 %v799, %v998
  %v1000 = vpop.f32.mrb[0].mxu0
  %1001 = vmatprep.mubr.f32.mxu0 0.0
  %v1002 = vand.u32 %v180, 4294901760
  %v1003 = vsub.f32 %v180, %v1002
  %v1004 = vand.u32 %v1003, 4294901760
  %1005 = vmatmul.mubr.f32.gmra.mrb[0].mxu0 %v1004
  %v1006 = vpop.f32.mrb[0].mxu0
  %v1007 = vadd.f32 %v806, %v1006
  %v1008 = vpop.f32.mrb[0].mxu0
  %1009 = vdwg.mxu0
  %1010 = vmatprep.subr.mxu0 0.0
  %v1011 = vand.u32 %v125, 4294901760
  %v1012 = vsub.f32 %v125, %v1011
  %v1013 = vand.u32 %v1012, 4294901760
  %1014 = vmatpush1.msra.mxu0 %v1013
  %1015 = vmatprep.subr.mxu0 0.0
  %v1016 = vand.u32 %v126, 4294901760
  %v1017 = vsub.f32 %v126, %v1016
  %v1018 = vand.u32 %v1017, 4294901760
  %1019 = vmatpush1.msra.mxu0 %v1018
  %1020 = vmatprep.subr.mxu0 0.0
  %v1021 = vand.u32 %v127, 4294901760
  %v1022 = vsub.f32 %v127, %v1021
  %v1023 = vand.u32 %v1022, 4294901760
  %1024 = vmatpush1.msra.mxu0 %v1023
  %1025 = vmatprep.subr.mxu0 0.0
  %v1026 = vand.u32 %v128, 4294901760
  %v1027 = vsub.f32 %v128, %v1026
  %v1028 = vand.u32 %v1027, 4294901760
  %1029 = vmatpush1.msra.mxu0 %v1028
  %1030 = vmatprep.subr.mxu0 0.0
  %v1031 = vand.u32 %v129, 4294901760
  %v1032 = vsub.f32 %v129, %v1031
  %v1033 = vand.u32 %v1032, 4294901760
  %1034 = vmatpush1.msra.mxu0 %v1033
  %1035 = vmatprep.subr.mxu0 0.0
  %v1036 = vand.u32 %v130, 4294901760
  %v1037 = vsub.f32 %v130, %v1036
  %v1038 = vand.u32 %v1037, 4294901760
  %1039 = vmatpush1.msra.mxu0 %v1038
  %1040 = vmatprep.subr.mxu0 0.0
  %v1041 = vand.u32 %v131, 4294901760
  %v1042 = vsub.f32 %v131, %v1041
  %v1043 = vand.u32 %v1042, 4294901760
  %1044 = vmatpush1.msra.mxu0 %v1043
  %1045 = vmatprep.subr.mxu0 0.0
  %v1046 = vand.u32 %v132, 4294901760
  %v1047 = vsub.f32 %v132, %v1046
  %v1048 = vand.u32 %v1047, 4294901760
  %1049 = vmatpush1.msra.mxu0 %v1048
  %1050 = vmatprep.subr.mxu0 0.0
  %1051 = vmatpush1.msra.mxu0 0.0
  %1052 = vmatprep.subr.mxu0 0.0
  %1053 = vmatpush1.msra.mxu0 0.0
  %1054 = vmatprep.subr.mxu0 0.0
  %1055 = vmatpush1.msra.mxu0 0.0
  %1056 = vmatprep.subr.mxu0 0.0
  %1057 = vmatpush1.msra.mxu0 0.0
  %1058 = vmatprep.subr.mxu0 0.0
  %1059 = vmatpush1.msra.mxu0 0.0
  %1060 = vmatprep.subr.mxu0 0.0
  %1061 = vmatpush1.msra.mxu0 0.0
  %1062 = vmatprep.subr.mxu0 0.0
  %1063 = vmatpush1.msra.mxu0 0.0
  %1064 = vmatprep.subr.mxu0 0.0
  %1065 = vmatpush1.msra.mxu0 0.0
  %1066 = vmatprep.subr.mxu0 0.0
  %1067 = vmatpush1.msra.mxu0 0.0
  %1068 = vmatprep.subr.mxu0 0.0
  %1069 = vmatpush1.msra.mxu0 0.0
  %1070 = vmatprep.subr.mxu0 0.0
  %1071 = vmatpush1.msra.mxu0 0.0
  %1072 = vmatprep.subr.mxu0 0.0
  %1073 = vmatpush1.msra.mxu0 0.0
  %1074 = vmatprep.subr.mxu0 0.0
  %1075 = vmatpush1.msra.mxu0 0.0
  %1076 = vmatprep.subr.mxu0 0.0
  %1077 = vmatpush1.msra.mxu0 0.0
  %1078 = vmatprep.subr.mxu0 0.0
  %1079 = vmatpush1.msra.mxu0 0.0
  %1080 = vmatprep.subr.mxu0 0.0
  %1081 = vmatpush1.msra.mxu0 0.0
  %1082 = vmatprep.subr.mxu0 0.0
  %1083 = vmatpush1.msra.mxu0 0.0
  %1084 = vmatprep.subr.mxu0 0.0
  %1085 = vmatpush1.msra.mxu0 0.0
  %1086 = vmatprep.subr.mxu0 0.0
  %1087 = vmatpush1.msra.mxu0 0.0
  %1088 = vmatprep.subr.mxu0 0.0
  %1089 = vmatpush1.msra.mxu0 0.0
  %1090 = vmatprep.subr.mxu0 0.0
  %1091 = vmatpush1.msra.mxu0 0.0
  %1092 = vmatprep.subr.mxu0 0.0
  %1093 = vmatpush1.msra.mxu0 0.0
  %1094 = vmatprep.subr.mxu0 0.0
  %1095 = vmatpush1.msra.mxu0 0.0
  %1096 = vmatprep.subr.mxu0 0.0
  %1097 = vmatpush1.msra.mxu0 0.0
  %1098 = vmatprep.mubr.f32.mxu0 0.0
  %v1099 = vand.u32 %v135, 4294901760
  %1100 = vmatmul.mubr.f32.gmra.mrb[0].mxu0 %v1099
  %v1101 = vpop.f32.mrb[0].mxu0
  %v1102 = vadd.f32 %v887, %v1101
  %v1103 = vpop.f32.mrb[0].mxu0
  %1104 = vmatprep.mubr.f32.mxu0 0.0
  %v1105 = vand.u32 %v138, 4294901760
  %1106 = vmatmul.mubr.f32.gmra.mrb[0].mxu0 %v1105
  %v1107 = vpop.f32.mrb[0].mxu0
  %v1108 = vadd.f32 %v895, %v1107
  %v1109 = vpop.f32.mrb[0].mxu0
  %1110 = vmatprep.mubr.f32.mxu0 0.0
  %v1111 = vand.u32 %v141, 4294901760
  %1112 = vmatmul.mubr.f32.gmra.mrb[0].mxu0 %v1111
  %v1113 = vpop.f32.mrb[0].mxu0
  %v1114 = vadd.f32 %v903, %v1113
  %v1115 = vpop.f32.mrb[0].mxu0
  %1116 = vmatprep.mubr.f32.mxu0 0.0
  %v1117 = vand.u32 %v144, 4294901760
  %1118 = vmatmul.mubr.f32.gmra.mrb[0].mxu0 %v1117
  %v1119 = vpop.f32.mrb[0].mxu0
  %v1120 = vadd.f32 %v911, %v1119
  %v1121 = vpop.f32.mrb[0].mxu0
  %1122 = vmatprep.mubr.f32.mxu0 0.0
  %v1123 = vand.u32 %v147, 4294901760
  %1124 = vmatmul.mubr.f32.gmra.mrb[0].mxu0 %v1123
  %v1125 = vpop.f32.mrb[0].mxu0
  %v1126 = vadd.f32 %v919, %v1125
  %v1127 = vpop.f32.mrb[0].mxu0
  %1128 = vmatprep.mubr.f32.mxu0 0.0
  %v1129 = vand.u32 %v150, 4294901760
  %1130 = vmatmul.mubr.f32.gmra.mrb[0].mxu0 %v1129
  %v1131 = vpop.f32.mrb[0].mxu0
  %v1132 = vadd.f32 %v927, %v1131
  %v1133 = vpop.f32.mrb[0].mxu0
  %1134 = vmatprep.mubr.f32.mxu0 0.0
  %v1135 = vand.u32 %v153, 4294901760
  %1136 = vmatmul.mubr.f32.gmra.mrb[0].mxu0 %v1135
  %v1137 = vpop.f32.mrb[0].mxu0
  %v1138 = vadd.f32 %v935, %v1137
  %v1139 = vpop.f32.mrb[0].mxu0
  %1140 = vmatprep.mubr.f32.mxu0 0.0
  %v1141 = vand.u32 %v156, 4294901760
  %1142 = vmatmul.mubr.f32.gmra.mrb[0].mxu0 %v1141
  %v1143 = vpop.f32.mrb[0].mxu0
  %v1144 = vadd.f32 %v943, %v1143
  %v1145 = vpop.f32.mrb[0].mxu0
  %1146 = vmatprep.mubr.f32.mxu0 0.0
  %v1147 = vand.u32 %v159, 4294901760
  %1148 = vmatmul.mubr.f32.gmra.mrb[0].mxu0 %v1147
  %v1149 = vpop.f32.mrb[0].mxu0
  %v1150 = vadd.f32 %v951, %v1149
  %v1151 = vpop.f32.mrb[0].mxu0
  %1152 = vmatprep.mubr.f32.mxu0 0.0
  %v1153 = vand.u32 %v162, 4294901760
  %1154 = vmatmul.mubr.f32.gmra.mrb[0].mxu0 %v1153
  %v1155 = vpop.f32.mrb[0].mxu0
  %v1156 = vadd.f32 %v959, %v1155
  %v1157 = vpop.f32.mrb[0].mxu0
  %1158 = vmatprep.mubr.f32.mxu0 0.0
  %v1159 = vand.u32 %v165, 4294901760
  %1160 = vmatmul.mubr.f32.gmra.mrb[0].mxu0 %v1159
  %v1161 = vpop.f32.mrb[0].mxu0
  %v1162 = vadd.f32 %v967, %v1161
  %v1163 = vpop.f32.mrb[0].mxu0
  %1164 = vmatprep.mubr.f32.mxu0 0.0
  %v1165 = vand.u32 %v168, 4294901760
  %1166 = vmatmul.mubr.f32.gmra.mrb[0].mxu0 %v1165
  %v1167 = vpop.f32.mrb[0].mxu0
  %v1168 = vadd.f32 %v975, %v1167
  %v1169 = vpop.f32.mrb[0].mxu0
  %1170 = vmatprep.mubr.f32.mxu0 0.0
  %v1171 = vand.u32 %v171, 4294901760
  %1172 = vmatmul.mubr.f32.gmra.mrb[0].mxu0 %v1171
  %v1173 = vpop.f32.mrb[0].mxu0
  %v1174 = vadd.f32 %v983, %v1173
  %v1175 = vpop.f32.mrb[0].mxu0
  %1176 = vmatprep.mubr.f32.mxu0 0.0
  %v1177 = vand.u32 %v174, 4294901760
  %1178 = vmatmul.mubr.f32.gmra.mrb[0].mxu0 %v1177
  %v1179 = vpop.f32.mrb[0].mxu0
  %v1180 = vadd.f32 %v991, %v1179
  %v1181 = vpop.f32.mrb[0].mxu0
  %1182 = vmatprep.mubr.f32.mxu0 0.0
  %v1183 = vand.u32 %v177, 4294901760
  %1184 = vmatmul.mubr.f32.gmra.mrb[0].mxu0 %v1183
  %v1185 = vpop.f32.mrb[0].mxu0
  %v1186 = vadd.f32 %v999, %v1185
  %v1187 = vpop.f32.mrb[0].mxu0
  %1188 = vmatprep.mubr.f32.mxu0 0.0
  %v1189 = vand.u32 %v180, 4294901760
  %1190 = vmatmul.mubr.f32.gmra.mrb[0].mxu0 %v1189
  %v1191 = vpop.f32.mrb[0].mxu0
  %v1192 = vadd.f32 %v1007, %v1191
  %v1193 = vpop.f32.mrb[0].mxu0
  %1194 = vdwg.mxu0
  %1195 = vmatprep.subr.mxu0 0.0
  %v1196 = vand.u32 %v125, 4294901760
  %1197 = vmatpush1.msra.mxu0 %v1196
  %1198 = vmatprep.subr.mxu0 0.0
  %v1199 = vand.u32 %v126, 4294901760
  %1200 = vmatpush1.msra.mxu0 %v1199
  %1201 = vmatprep.subr.mxu0 0.0
  %v1202 = vand.u32 %v127, 4294901760
  %1203 = vmatpush1.msra.mxu0 %v1202
  %1204 = vmatprep.subr.mxu0 0.0
  %v1205 = vand.u32 %v128, 4294901760
  %1206 = vmatpush1.msra.mxu0 %v1205
  %1207 = vmatprep.subr.mxu0 0.0
  %v1208 = vand.u32 %v129, 4294901760
  %1209 = vmatpush1.msra.mxu0 %v1208
  %1210 = vmatprep.subr.mxu0 0.0
  %v1211 = vand.u32 %v130, 4294901760
  %1212 = vmatpush1.msra.mxu0 %v1211
  %1213 = vmatprep.subr.mxu0 0.0
  %v1214 = vand.u32 %v131, 4294901760
  %1215 = vmatpush1.msra.mxu0 %v1214
  %1216 = vmatprep.subr.mxu0 0.0
  %v1217 = vand.u32 %v132, 4294901760
  %1218 = vmatpush1.msra.mxu0 %v1217
  %1219 = vmatprep.subr.mxu0 0.0
  %1220 = vmatpush1.msra.mxu0 0.0
  %1221 = vmatprep.subr.mxu0 0.0
  %1222 = vmatpush1.msra.mxu0 0.0
  %1223 = vmatprep.subr.mxu0 0.0
  %1224 = vmatpush1.msra.mxu0 0.0
  %1225 = vmatprep.subr.mxu0 0.0
  %1226 = vmatpush1.msra.mxu0 0.0
  %1227 = vmatprep.subr.mxu0 0.0
  %1228 = vmatpush1.msra.mxu0 0.0
  %1229 = vmatprep.subr.mxu0 0.0
  %1230 = vmatpush1.msra.mxu0 0.0
  %1231 = vmatprep.subr.mxu0 0.0
  %1232 = vmatpush1.msra.mxu0 0.0
  %1233 = vmatprep.subr.mxu0 0.0
  %1234 = vmatpush1.msra.mxu0 0.0
  %1235 = vmatprep.subr.mxu0 0.0
  %1236 = vmatpush1.msra.mxu0 0.0
  %1237 = vmatprep.subr.mxu0 0.0
  %1238 = vmatpush1.msra.mxu0 0.0
  %1239 = vmatprep.subr.mxu0 0.0
  %1240 = vmatpush1.msra.mxu0 0.0
  %1241 = vmatprep.subr.mxu0 0.0
  %1242 = vmatpush1.msra.mxu0 0.0
  %1243 = vmatprep.subr.mxu0 0.0
  %1244 = vmatpush1.msra.mxu0 0.0
  %1245 = vmatprep.subr.mxu0 0.0
  %1246 = vmatpush1.msra.mxu0 0.0
  %1247 = vmatprep.subr.mxu0 0.0
  %1248 = vmatpush1.msra.mxu0 0.0
  %1249 = vmatprep.subr.mxu0 0.0
  %1250 = vmatpush1.msra.mxu0 0.0
  %1251 = vmatprep.subr.mxu0 0.0
  %1252 = vmatpush1.msra.mxu0 0.0
  %1253 = vmatprep.subr.mxu0 0.0
  %1254 = vmatpush1.msra.mxu0 0.0
  %1255 = vmatprep.subr.mxu0 0.0
  %1256 = vmatpush1.msra.mxu0 0.0
  %1257 = vmatprep.subr.mxu0 0.0
  %1258 = vmatpush1.msra.mxu0 0.0
  %1259 = vmatprep.subr.mxu0 0.0
  %1260 = vmatpush1.msra.mxu0 0.0
  %1261 = vmatprep.subr.mxu0 0.0
  %1262 = vmatpush1.msra.mxu0 0.0
  %1263 = vmatprep.subr.mxu0 0.0
  %1264 = vmatpush1.msra.mxu0 0.0
  %1265 = vmatprep.subr.mxu0 0.0
  %1266 = vmatpush1.msra.mxu0 0.0
  %1267 = vmatprep.mubr.f32.mxu0 0.0
  %v1268 = vand.u32 %v135, 4294901760
  %1269 = vmatmul.mubr.f32.gmra.mrb[0].mxu0 %v1268
  %v1270 = vpop.f32.mrb[0].mxu0
  %v1271 = vadd.f32 %v1102, %v1270
  %v1272 = vpop.f32.mrb[0].mxu0
  %1273 = vmatprep.mubr.f32.mxu0 0.0
  %v1274 = vand.u32 %v138, 4294901760
  %1275 = vmatmul.mubr.f32.gmra.mrb[0].mxu0 %v1274
  %v1276 = vpop.f32.mrb[0].mxu0
  %v1277 = vadd.f32 %v1108, %v1276
  %v1278 = vpop.f32.mrb[0].mxu0
  %1279 = vmatprep.mubr.f32.mxu0 0.0
  %v1280 = vand.u32 %v141, 4294901760
  %1281 = vmatmul.mubr.f32.gmra.mrb[0].mxu0 %v1280
  %v1282 = vpop.f32.mrb[0].mxu0
  %v1283 = vadd.f32 %v1114, %v1282
  %v1284 = vpop.f32.mrb[0].mxu0
  %1285 = vmatprep.mubr.f32.mxu0 0.0
  %v1286 = vand.u32 %v144, 4294901760
  %1287 = vmatmul.mubr.f32.gmra.mrb[0].mxu0 %v1286
  %v1288 = vpop.f32.mrb[0].mxu0
  %v1289 = vadd.f32 %v1120, %v1288
  %v1290 = vpop.f32.mrb[0].mxu0
  %1291 = vmatprep.mubr.f32.mxu0 0.0
  %v1292 = vand.u32 %v147, 4294901760
  %1293 = vmatmul.mubr.f32.gmra.mrb[0].mxu0 %v1292
  %v1294 = vpop.f32.mrb[0].mxu0
  %v1295 = vadd.f32 %v1126, %v1294
  %v1296 = vpop.f32.mrb[0].mxu0
  %1297 = vmatprep.mubr.f32.mxu0 0.0
  %v1298 = vand.u32 %v150, 4294901760
  %1299 = vmatmul.mubr.f32.gmra.mrb[0].mxu0 %v1298
  %v1300 = vpop.f32.mrb[0].mxu0
  %v1301 = vadd.f32 %v1132, %v1300
  %v1302 = vpop.f32.mrb[0].mxu0
  %1303 = vmatprep.mubr.f32.mxu0 0.0
  %v1304 = vand.u32 %v153, 4294901760
  %1305 = vmatmul.mubr.f32.gmra.mrb[0].mxu0 %v1304
  %v1306 = vpop.f32.mrb[0].mxu0
  %v1307 = vadd.f32 %v1138, %v1306
  %v1308 = vpop.f32.mrb[0].mxu0
  %1309 = vmatprep.mubr.f32.mxu0 0.0
  %v1310 = vand.u32 %v156, 4294901760
  %1311 = vmatmul.mubr.f32.gmra.mrb[0].mxu0 %v1310
  %v1312 = vpop.f32.mrb[0].mxu0
  %v1313 = vadd.f32 %v1144, %v1312
  %v1314 = vpop.f32.mrb[0].mxu0
  %1315 = vmatprep.mubr.f32.mxu0 0.0
  %v1316 = vand.u32 %v159, 4294901760
  %1317 = vmatmul.mubr.f32.gmra.mrb[0].mxu0 %v1316
  %v1318 = vpop.f32.mrb[0].mxu0
  %v1319 = vadd.f32 %v1150, %v1318
  %v1320 = vpop.f32.mrb[0].mxu0
  %1321 = vmatprep.mubr.f32.mxu0 0.0
  %v1322 = vand.u32 %v162, 4294901760
  %1323 = vmatmul.mubr.f32.gmra.mrb[0].mxu0 %v1322
  %v1324 = vpop.f32.mrb[0].mxu0
  %v1325 = vadd.f32 %v1156, %v1324
  %v1326 = vpop.f32.mrb[0].mxu0
  %1327 = vmatprep.mubr.f32.mxu0 0.0
  %v1328 = vand.u32 %v165, 4294901760
  %1329 = vmatmul.mubr.f32.gmra.mrb[0].mxu0 %v1328
  %v1330 = vpop.f32.mrb[0].mxu0
  %v1331 = vadd.f32 %v1162, %v1330
  %v1332 = vpop.f32.mrb[0].mxu0
  %1333 = vmatprep.mubr.f32.mxu0 0.0
  %v1334 = vand.u32 %v168, 4294901760
  %1335 = vmatmul.mubr.f32.gmra.mrb[0].mxu0 %v1334
  %v1336 = vpop.f32.mrb[0].mxu0
  %v1337 = vadd.f32 %v1168, %v1336
  %v1338 = vpop.f32.mrb[0].mxu0
  %1339 = vmatprep.mubr.f32.mxu0 0.0
  %v1340 = vand.u32 %v171, 4294901760
  %1341 = vmatmul.mubr.f32.gmra.mrb[0].mxu0 %v1340
  %v1342 = vpop.f32.mrb[0].mxu0
  %v1343 = vadd.f32 %v1174, %v1342
  %v1344 = vpop.f32.mrb[0].mxu0
  %1345 = vmatprep.mubr.f32.mxu0 0.0
  %v1346 = vand.u32 %v174, 4294901760
  %1347 = vmatmul.mubr.f32.gmra.mrb[0].mxu0 %v1346
  %v1348 = vpop.f32.mrb[0].mxu0
  %v1349 = vadd.f32 %v1180, %v1348
  %v1350 = vpop.f32.mrb[0].mxu0
  %1351 = vmatprep.mubr.f32.mxu0 0.0
  %v1352 = vand.u32 %v177, 4294901760
  %1353 = vmatmul.mubr.f32.gmra.mrb[0].mxu0 %v1352
  %v1354 = vpop.f32.mrb[0].mxu0
  %v1355 = vadd.f32 %v1186, %v1354
  %v1356 = vpop.f32.mrb[0].mxu0
  %1357 = vmatprep.mubr.f32.mxu0 0.0
  %v1358 = vand.u32 %v180, 4294901760
  %1359 = vmatmul.mubr.f32.gmra.mrb[0].mxu0 %v1358
  %v1360 = vpop.f32.mrb[0].mxu0
  %v1361 = vadd.f32 %v1192, %v1360
  %v1362 = vpop.f32.mrb[0].mxu0
  %1363 = vdwg.mxu0
  %vm1364 = vcmask 261120
  %1365 = vst.msk [vmem:[%s2] sm:$0xff] %vm1364, %v1271
  %1366 = vst.msk [vmem:[%s2 + $0x8] sm:$0xff] %vm1364, %v1277
  %1367 = vst.msk [vmem:[%s2 + $0x10] sm:$0xff] %vm1364, %v1283
  %1368 = vst.msk [vmem:[%s2 + $0x18] sm:$0xff] %vm1364, %v1289
  %1369 = vst.msk [vmem:[%s2 + $0x20] sm:$0xff] %vm1364, %v1295
  %1370 = vst.msk [vmem:[%s2 + $0x28] sm:$0xff] %vm1364, %v1301
  %1371 = vst.msk [vmem:[%s2 + $0x30] sm:$0xff] %vm1364, %v1307
  %1372 = vst.msk [vmem:[%s2 + $0x38] sm:$0xff] %vm1364, %v1313
  %1373 = vst.msk [vmem:[%s2 + $0x40] sm:$0xff] %vm1364, %v1319
  %1374 = vst.msk [vmem:[%s2 + $0x48] sm:$0xff] %vm1364, %v1325
  %1375 = vst.msk [vmem:[%s2 + $0x50] sm:$0xff] %vm1364, %v1331
  %1376 = vst.msk [vmem:[%s2 + $0x58] sm:$0xff] %vm1364, %v1337
  %1377 = vst.msk [vmem:[%s2 + $0x60] sm:$0xff] %vm1364, %v1343
  %1378 = vst.msk [vmem:[%s2 + $0x68] sm:$0xff] %vm1364, %v1349
  %1379 = vst.msk [vmem:[%s2 + $0x70] sm:$0xff] %vm1364, %v1355
  %1380 = vst.msk [vmem:[%s2 + $0x78] sm:$0xff] %vm1364, %v1361
  // Predicated region
  $region10: #{tpu_custom_call.1} parent=0 // pred_check
    _
  $region11: #{tpu_custom_call.1} parent=0 // pred_check_branch
    %1382 = sbr.rel (0) target = $region13
  $region12: #{tpu_custom_call.1} parent=0 // pred_region
    _
  $region13: #{tpu_custom_call.1} parent=0 // pred_fallthru
    _
  // Predicated region
  $region14: #{tpu_custom_call.1} parent=0 // pred_check
    _
  $region15: #{tpu_custom_call.1} parent=0 // pred_check_branch
    %1384 = sbr.rel (0) target = $region17
  $region16: #{tpu_custom_call.1} parent=0 // pred_region
    _
  $region17: #{tpu_custom_call.1} parent=0 // pred_fallthru
    _

</llo_original>
